<compile_context>
chip_gen: v7x
topology: tpu7x:2x2x1
jax: 0.10.0
libtpu: 0.0.40
codegen_flags: <defaults>
</compile_context>

<pallas_src>
import jax
import jax.numpy as jnp
from jax.experimental import pallas as pl
from jax.experimental.pallas import tpu as pltpu


# --------------------------------------------------------------------------
# Slice definitions (verbatim port of the PyTorch helpers)
# --------------------------------------------------------------------------
def get_tomato_slice(idx):
    if idx == 0:
        return [0, 1, 2, 3, 463, 464, 465]
    return [
        4 + (idx - 1) * 3, 4 + (idx - 1) * 3 + 1, 4 + (idx - 1) * 3 + 2,
        157 + (idx - 1) * 6, 157 + (idx - 1) * 6 + 1, 157 + (idx - 1) * 6 + 2,
        157 + (idx - 1) * 6 + 3, 157 + (idx - 1) * 6 + 4, 157 + (idx - 1) * 6 + 5,
        463 + idx * 3, 463 + idx * 3 + 1, 463 + idx * 3 + 2,
    ]


def get_part_slice(idx_list, func):
    result = []
    for idx in idx_list:
        result.extend(func(idx))
    return result


def build_part_slices():
    func = get_tomato_slice
    return [
        get_part_slice([0], func),                    # root
        get_part_slice([12, 15], func),               # head
        get_part_slice([3, 6, 9], func),              # stem
        get_part_slice([14, 17, 19, 21], func),       # larm
        get_part_slice([13, 16, 18, 20], func),       # rarm
        get_part_slice([2, 5, 8, 11], func),          # lleg
        get_part_slice([1, 4, 7, 10], func),          # rleg
        get_part_slice(range(22, 37), func),          # lhnd
        get_part_slice(range(37, 52), func),          # rhnd
        list(range(619, 669)),                        # face
    ]


D_IN = 669     # face slice goes up to index 668


def _round_up(x, m):
    return (x + m - 1) // m * m


def _choose_row_tile(rows, cap=1024):
    """Row tile: as big as possible (up to `cap`), but >=2 grid steps whenever
    there is enough work, so v7x's two TensorCores both get row tiles.  Large
    tiles are rounded to multiples of 256 (full MXU passes); tiny inputs use a
    single small tile (sublane multiple of 8)."""
    if rows <= 16:
        return _round_up(max(rows, 8), 8)
    tm = _round_up(pl.cdiv(rows, 2), 8)       # at least two grid steps
    if tm > 256:
        tm = _round_up(tm, 256)
    return min(tm, cap)


# --------------------------------------------------------------------------
# Pallas kernel: lane-dense streaming matmul, weights resident in VMEM
# --------------------------------------------------------------------------
def _pose_encoder_kernel(x_ref, w_ref, b_ref, o_ref):
    # x_ref: (tm, 669)  f32 input tile (full K dim -> no undefined lane tail)
    # w_ref: (669, OUT) compute dtype, constant block -> loaded once
    # b_ref: (1, OUT)   f32
    # o_ref: (tm, OUT)  output dtype (partial last row tile masked by Pallas)
    x = x_ref[...].astype(w_ref.dtype)        # bf16 cast on VPU, hidden
    y = jnp.dot(x, w_ref[...], preferred_element_type=jnp.float32)
    o_ref[...] = (y + b_ref[...]).astype(o_ref.dtype)


def single_pose_encoder_forward(motion, w_comb, b_comb, *,
                                compute_dtype=jnp.bfloat16,
                                out_dtype=None,
                                row_tile_cap=1024):
    """motion: [B, T, 669] f32; w_comb: [669, OUT] f32 combined block-sparse
    weight; b_comb: [1, OUT] f32.  Returns [B, T, OUT]."""
    B, T, D = motion.shape
    Dw, OUT = w_comb.shape
    assert Dw == D, (Dw, D)
    rows = B * T
    out_dtype = motion.dtype if out_dtype is None else out_dtype

    x = motion.reshape(rows, D)                 # free reshape; no pad, no cast
    w = w_comb.astype(compute_dtype)            # tiny one-time parameter cast
    b = b_comb.reshape(1, OUT).astype(jnp.float32)

    tm = _choose_row_tile(rows, row_tile_cap)
    grid = (pl.cdiv(rows, tm),)

    cost = pl.CostEstimate(
        flops=2 * rows * D * OUT,
        transcendentals=0,
        bytes_accessed=(x.size * x.dtype.itemsize
                        + w.size * w.dtype.itemsize
                        + b.size * b.dtype.itemsize
                        + rows * OUT * jnp.dtype(out_dtype).itemsize),
    )

    out = pl.pallas_call(
        _pose_encoder_kernel,
        out_shape=jax.ShapeDtypeStruct((rows, OUT), out_dtype),
        grid_spec=pltpu.PrefetchScalarGridSpec(
            num_scalar_prefetch=0,
            grid=grid,
            in_specs=[
                # Full last dim (669): legal via the full-dim exception and no
                # garbage K lanes; only the row axis is tiled.
                pl.BlockSpec((tm, D), lambda i: (i, 0)),
                # Constant block index -> weights/bias stay VMEM-resident for
                # the whole grid (no per-step re-DMA).
                pl.BlockSpec((Dw, OUT), lambda i: (0, 0)),
                pl.BlockSpec((1, OUT), lambda i: (0, 0)),
            ],
            out_specs=pl.BlockSpec((tm, OUT), lambda i: (i, 0)),
        ),
        compiler_params=pltpu.CompilerParams(
            dimension_semantics=("parallel",),      # megacore sharding on v7x
            vmem_limit_bytes=32 * 1024 * 1024,
        ),
        cost_estimate=cost,
    )(x, w, b)

    return out.reshape(B, T, OUT)


# --------------------------------------------------------------------------
# Parameter construction (deterministic, nn.Linear-style init)
# --------------------------------------------------------------------------
def build_params(key, latent_dim, parts):
    """Returns combined weight [669, OUT], bias [1, OUT] and the raw per-part
    (W, b) tensors for the module-semantics reference check."""
    out = latent_dim * len(parts)
    w_comb = jnp.zeros((D_IN, out), jnp.float32)
    b_comb = jnp.zeros((1, out), jnp.float32)
    raw = []
    for p, sl in enumerate(parts):
        key, kw, kb = jax.random.split(key, 3)
        in_f = len(sl)
        bound = 1.0 / (in_f ** 0.5)
        W = jax.random.uniform(kw, (latent_dim, in_f), jnp.float32, -bound, bound)
        bvec = jax.random.uniform(kb, (latent_dim,), jnp.float32, -bound, bound)
        raw.append((W, bvec))
        idx = jnp.asarray(sl, jnp.int32)
        w_comb = w_comb.at[idx, p * latent_dim:(p + 1) * latent_dim].set(W.T)
        b_comb = b_comb.at[0, p * latent_dim:(p + 1) * latent_dim].set(bvec)
    return w_comb, b_comb, raw


def reference_forward(motion, raw, parts):
    """Plain-JAX mimic of the PyTorch module (gather slice, per-part Linear)."""
    feats = []
    for p, sl in enumerate(parts):
        W, bvec = raw[p]
        x = motion[:, :, jnp.asarray(sl, jnp.int32)]           # (B, T, len_p)
        feats.append(jnp.einsum('btf,lf->btl', x, W) + bvec)   # (B, T, L)
    return jnp.concatenate(feats, axis=-1)


# --------------------------------------------------------------------------
if __name__ == "__main__":
    B, T = 4, 8
    latent_dim = 32
    parts = build_part_slices()
    assert sum(len(p) for p in parts) == D_IN
    OUT = 10 * latent_dim

    key = jax.random.PRNGKey(0)
    key, k_motion, k_params = jax.random.split(key, 3)
    motion = jax.random.normal(k_motion, (B, T, D_IN), jnp.float32)

    w_comb, b_comb, raw = build_params(k_params, latent_dim, parts)

    # Module-semantics reference (per-part gather + Linear + concat), f32.
    ref = reference_forward(motion, raw, parts)

    # 1) f32-operand kernel path: must match the module reference tightly.
    out_f32 = single_pose_encoder_forward(motion, w_comb, b_comb,
                                          compute_dtype=jnp.float32)
    out_f32 = jax.block_until_ready(out_f32)
    assert out_f32.shape == (B, T, OUT)
    assert jnp.allclose(out_f32, ref, atol=1e-4, rtol=1e-4), \
        float(jnp.max(jnp.abs(out_f32 - ref)))

    # 2) Default bf16-operand kernel (fast path): compare against a dense bf16
    #    JAX reference computing the same math (bf16 operands, f32 accum).
    out_bf16 = single_pose_encoder_forward(motion, w_comb, b_comb)
    out_bf16 = jax.block_until_ready(out_bf16)
    assert out_bf16.shape == (B, T, OUT)
    xb = motion.reshape(B * T, D_IN).astype(jnp.bfloat16)
    ref_bf16 = (jnp.dot(xb, w_comb.astype(jnp.bfloat16),
                        preferred_element_type=jnp.float32)
                + b_comb).reshape(B, T, OUT)
    assert jnp.allclose(out_bf16, ref_bf16, atol=1e-2, rtol=1e-2), \
        float(jnp.max(jnp.abs(out_bf16 - ref_bf16)))
    # ... and loosely against the f32 module reference (bf16 quantization noise).
    assert jnp.allclose(out_bf16, ref, atol=2.5e-1, rtol=5e-2), \
        float(jnp.max(jnp.abs(out_bf16 - ref)))

    print("KERNEL_OK")
</pallas_src>

<mosaic_0001>
module attributes {stable_mosaic.version = 11 : i64} {
  func.func @_pose_encoder_kernel(%arg0: i32, %arg1: memref<16x669xf32, #tpu.memory_space<vmem>>, %arg2: memref<669x320xf32, #tpu.memory_space<vmem>>, %arg3: memref<1x320xf32, #tpu.memory_space<vmem>>, %arg4: memref<16x320xf32, #tpu.memory_space<vmem>>) attributes {dimension_semantics = [#tpu.dimension_semantics<parallel>], iteration_bounds = array<i64: 2>, scalar_prefetch = 0 : i64, scratch_operands = 0 : i64, tpu.core_type = #tpu.core_type<tc>, window_params = [{transform_indices = @transform_0, window_bounds = array<i64: 16, 669>}, {pipeline_mode = #tpu.pipeline_mode<synchronous>, transform_indices = @transform_1, window_bounds = array<i64: 669, 320>}, {pipeline_mode = #tpu.pipeline_mode<synchronous>, transform_indices = @transform_2, window_bounds = array<i64: 1, 320>}, {transform_indices = @transform_3, window_bounds = array<i64: 16, 320>}]} {
    %c0 = arith.constant 0 : index
    %c0_0 = arith.constant 0 : index
    %0 = vector.load %arg1[%c0, %c0_0] : memref<16x669xf32, #tpu.memory_space<vmem>>, vector<16x669xf32>
    %c0_1 = arith.constant 0 : index
    %c0_2 = arith.constant 0 : index
    %1 = vector.load %arg2[%c0_1, %c0_2] : memref<669x320xf32, #tpu.memory_space<vmem>>, vector<669x320xf32>
    %cst = arith.constant dense<0.000000e+00> : vector<16x320xf32>
    %2 = tpu.matmul %0, %1, %cst {dimension_numbers = #tpu.dot_dimension_numbers<[1], [0], [0], [1], [0, 0, 1, 1], [], []>} : vector<16x669xf32>, vector<669x320xf32>, vector<16x320xf32> -> vector<16x320xf32>
    %c0_3 = arith.constant 0 : index
    %c0_4 = arith.constant 0 : index
    %3 = vector.load %arg3[%c0_3, %c0_4] : memref<1x320xf32, #tpu.memory_space<vmem>>, vector<1x320xf32>
    %4 = vector.broadcast %3 : vector<1x320xf32> to vector<16x320xf32>
    %5 = arith.addf %2, %4 : vector<16x320xf32>
    %c0_5 = arith.constant 0 : index
    %c0_6 = arith.constant 0 : index
    %6 = vector.load %arg4[%c0_5, %c0_6] : memref<16x320xf32, #tpu.memory_space<vmem>>, vector<16x320xf32>
    tpu.vector_store %arg4[%c0_5, %c0_6], %5 {strides = array<i32>} : memref<16x320xf32, #tpu.memory_space<vmem>>, vector<16x320xf32>,
    return
  }
  func.func @transform_0(%arg0: i32) -> (i32, i32) {
    %c0_i32 = arith.constant 0 : i32
    %c0_i32_0 = arith.constant 0 : i32
    return %arg0, %c0_i32 : i32, i32
  }
  func.func @transform_1(%arg0: i32) -> (i32, i32) {
    %c0_i32 = arith.constant 0 : i32
    %c0_i32_0 = arith.constant 0 : i32
    %c0_i32_1 = arith.constant 0 : i32
    return %c0_i32, %c0_i32_0 : i32, i32
  }
  func.func @transform_2(%arg0: i32) -> (i32, i32) {
    %c0_i32 = arith.constant 0 : i32
    %c0_i32_0 = arith.constant 0 : i32
    %c0_i32_1 = arith.constant 0 : i32
    return %c0_i32, %c0_i32_0 : i32, i32
  }
  func.func @transform_3(%arg0: i32) -> (i32, i32) {
    %c0_i32 = arith.constant 0 : i32
    %c0_i32_0 = arith.constant 0 : i32
    return %arg0, %c0_i32 : i32, i32
  }
}

</mosaic_0001>

<llo_original>
// kernel: tpu_custom_call.1
$region0: #{tpu_custom_call.1}
  #allocation0 [shape = 'u32[]', space=smem, size = 0x4, offset = 0x4, fixed_abs, tag = 'smem constant byte address 0x4 - core index']
  #allocation1 [shape = 'u32[144,128]{1,0:T(1,128)}', space=vmem, size = 0x12000, scoped, tag = 'internal scratch']
  %s0 = inlined_call_operand.vmem [shape: f32[32,669], index: 0, kind: input, shape index: {}]
  %s1 = inlined_call_operand.vmem [shape: f32[669,320], index: 1, kind: input, shape index: {}]
  %s2 = inlined_call_operand.vmem [shape: f32[1,320], index: 2, kind: input, shape index: {}]
  %s3 = inlined_call_operand.hbm [shape: f32[32,320], index: 3, kind: output, shape index: {}]
  %s4 = sld [smem:[#allocation0]]
  $region45: #{tpu_custom_call.1} parent=0
    _
  %s6 = ssub.s32 1, %s4
  %s7 = scalar_select 0, %s6, %s4
  $region1: #{tpu_custom_call.1} parent=0
    #allocation2 [shape = 'u8[49152]{0}', space=vmem, size = 0xc000, scoped, tag = 'output window, operand 0']
    #allocation3 [shape = 's32[2]{0}', space=sflag, size = 0x8, scoped, tag = 'scoped memory for tpu_custom_call.1']
    %8 = vsyncpa [#allocation3], 0
    %s9 = scalar_lea.sflag [#allocation3], 1
    %10 = vsyncpa %s9, 0
    loop: start=0, step=1, limit=4
    $region2: #{tpu_custom_call.1} parent=1 // loop_pre_header
      _
    $region3: #{tpu_custom_call.1} parent=1 // loop_header
      %s12 = sphi 0, %s16
      %p13 = scmp.ge.s32.totalorder %s12, 4
      %s22 = sphi 0, %s24
      %s25 = sphi 0, %s22
      %s26 = sphi 0, %s25
      %s42 = sphi 0, %s26
      %s46 = sphi 0, %s46
      %s48 = sphi 0, %s46
      %s49 = sphi 0, %s48
      %s63 = sphi 0, %s49
      %s67 = sphi 0, %s67
      %s69 = sphi 0, %s67
      %s70 = sphi 0, %s69
      %s84 = sphi 0, %s70
      %s90 = sphi 0, %s92
      %s93 = sphi 0, %s90
      %s94 = sphi 0, %s93
      %s110 = sphi 0, %s94
    $region4: #{tpu_custom_call.1} parent=1 // loop_header_branch
      %15 = sbr.rel (%p13) target = $region8
    $region5: #{tpu_custom_call.1} parent=1 // loop_body
      %s17 = ssub.s32 %s12, 1
      %s18 = ssub.s32 %s12, 2
      %s19 = sadd.s32 %s12, 1
      %s20 = ssub.s32 %s12, %s19
      %p21 = scmp.eq.s32.totalorder %s20, 0
      %s23 = sadd.s32 %s22, 1
      %s24 = scalar_select %p21, %s22, %s23
      %p27 = pneg %p21
      %p28 = scmp.eq.s32.totalorder %s12, 1
      %p29 = por %p27, %p28
      %p30 = scmp.ne.s32.totalorder %s22, %s25
      %p31 = scmp.eq.s32.totalorder %s12, 0
      %p32 = por %p30, %p31
      %p33 = scmp.ne.s32.totalorder %s22, %s25
      %p34 = scmp.eq.s32.totalorder %s17, 1
      %p35 = por %p33, %p34
      %p36 = scmp.ne.s32.totalorder %s25, %s26
      %p37 = scmp.eq.s32.totalorder %s17, 0
      %p38 = por %p36, %p37
      %p39 = scmp.ne.s32.totalorder %s25, %s26
      %p40 = scmp.eq.s32.totalorder %s18, 1
      %p41 = por %p39, %p40
      %p43 = scmp.ne.s32.totalorder %s26, %s42
      %p44 = scmp.eq.s32.totalorder %s18, 0
      %p45 = por %p43, %p44
      %s47 = sadd.s32 %s46, 1
      %p50 = scmp.eq.s32.totalorder %s12, 1
      %p51 = scmp.ne.s32.totalorder %s46, %s48
      %p52 = scmp.eq.s32.totalorder %s12, 0
      %p53 = por %p51, %p52
      %p54 = scmp.ne.s32.totalorder %s46, %s48
      %p55 = scmp.eq.s32.totalorder %s17, 1
      %p56 = por %p54, %p55
      %p57 = scmp.ne.s32.totalorder %s48, %s49
      %p58 = scmp.eq.s32.totalorder %s17, 0
      %p59 = por %p57, %p58
      %p60 = scmp.ne.s32.totalorder %s48, %s49
      %p61 = scmp.eq.s32.totalorder %s18, 1
      %p62 = por %p60, %p61
      %p64 = scmp.ne.s32.totalorder %s49, %s63
      %p65 = scmp.eq.s32.totalorder %s18, 0
      %p66 = por %p64, %p65
      %s68 = sadd.s32 %s67, 1
      %p71 = scmp.eq.s32.totalorder %s12, 1
      %p72 = scmp.ne.s32.totalorder %s67, %s69
      %p73 = scmp.eq.s32.totalorder %s12, 0
      %p74 = por %p72, %p73
      %p75 = scmp.ne.s32.totalorder %s67, %s69
      %p76 = scmp.eq.s32.totalorder %s17, 1
      %p77 = por %p75, %p76
      %p78 = scmp.ne.s32.totalorder %s69, %s70
      %p79 = scmp.eq.s32.totalorder %s17, 0
      %p80 = por %p78, %p79
      %p81 = scmp.ne.s32.totalorder %s69, %s70
      %p82 = scmp.eq.s32.totalorder %s18, 1
      %p83 = por %p81, %p82
      %p85 = scmp.ne.s32.totalorder %s70, %s84
      %p86 = scmp.eq.s32.totalorder %s18, 0
      %p87 = por %p85, %p86
      %s88 = ssub.s32 %s12, %s19
      %p89 = scmp.eq.s32.totalorder %s88, 0
      %s91 = sadd.s32 %s90, 1
      %s92 = scalar_select %p89, %s90, %s91
      %p95 = pneg %p89
      %p96 = scmp.eq.s32.totalorder %s12, 1
      %p97 = por %p95, %p96
      %p98 = scmp.ne.s32.totalorder %s90, %s93
      %p99 = scmp.eq.s32.totalorder %s12, 0
      %p100 = por %p98, %p99
      %p101 = scmp.ne.s32.totalorder %s90, %s93
      %p102 = scmp.eq.s32.totalorder %s17, 1
      %p103 = por %p101, %p102
      %p104 = scmp.ne.s32.totalorder %s93, %s94
      %p105 = scmp.eq.s32.totalorder %s17, 0
      %p106 = por %p104, %p105
      %p107 = scmp.ne.s32.totalorder %s93, %s94
      %p108 = scmp.eq.s32.totalorder %s18, 1
      %p109 = por %p107, %p108
      %p111 = scmp.ne.s32.totalorder %s94, %s110
      %p112 = scmp.eq.s32.totalorder %s18, 0
      %p113 = por %p111, %p112
      %p114 = scmp.le.s32.totalorder 1, %s12
      %p115 = scmp.lt.s32.totalorder %s12, 3
      %p116 = pnand %p114, %p115
      %p117 = pneg %p116
      // Predicated region
      $region9: #{tpu_custom_call.1} parent=5 // pred_check
        _
      $region10: #{tpu_custom_call.1} parent=5 // pred_check_branch
        %119 = sbr.rel (%p116) target = $region12
      $region11: #{tpu_custom_call.1} parent=5 // pred_region
        %s120 = ssub.s32 %s12, 1
        // Predicated region
        $region13: #{tpu_custom_call.1} parent=11 // pred_check
          %p121 = pneg %p59
        $region14: #{tpu_custom_call.1} parent=11 // pred_check_branch
          %123 = sbr.rel (%p121) target = $region16
        $region15: #{tpu_custom_call.1} parent=11 // pred_region
          _
        $region16: #{tpu_custom_call.1} parent=11 // pred_fallthru
          _
        // Predicated region
        $region17: #{tpu_custom_call.1} parent=11 // pred_check
          %p124 = pneg %p80
        $region18: #{tpu_custom_call.1} parent=11 // pred_check_branch
          %126 = sbr.rel (%p124) target = $region20
        $region19: #{tpu_custom_call.1} parent=11 // pred_region
          _
        $region20: #{tpu_custom_call.1} parent=11 // pred_fallthru
          _
      $region12: #{tpu_custom_call.1} parent=5 // pred_fallthru
        _
      %p127 = scmp.lt.s32.totalorder %s12, 2
      // Predicated region
      $region21: #{tpu_custom_call.1} parent=5 // pred_check
        %p128 = pneg %p127
      $region22: #{tpu_custom_call.1} parent=5 // pred_check_branch
        %130 = sbr.rel (%p128) target = $region24
      $region23: #{tpu_custom_call.1} parent=5 // pred_region
        // Predicated region
        $region25: #{tpu_custom_call.1} parent=23 // pred_check
          %p131 = pneg %p32
        $region26: #{tpu_custom_call.1} parent=23 // pred_check_branch
          %133 = sbr.rel (%p131) target = $region28
        $region27: #{tpu_custom_call.1} parent=23 // pred_region
          %s134 = smul.u32 2, %s12
          %p135 = scmp.lt.s32.totalorder %s134, 3
          %s136 = scalar_select %p135, %s134, 3
          %s137 = smul.addr %s136, 6
          %s138 = smul.addr %s137, 8
          %s139 = scalar_lea.vmem %s0, %s138
          %s140 = smul.u32 2, %s12
        $region28: #{tpu_custom_call.1} parent=23 // pred_fallthru
          _
      $region24: #{tpu_custom_call.1} parent=5 // pred_fallthru
        _
      %p141 = scmp.le.s32.totalorder 1, %s12
      %p142 = scmp.lt.s32.totalorder %s12, 3
      %p143 = pnand %p141, %p142
      %p144 = pneg %p143
      // Predicated region
      $region29: #{tpu_custom_call.1} parent=5 // pred_check
        _
      $region30: #{tpu_custom_call.1} parent=5 // pred_check_branch
        %146 = sbr.rel (%p143) target = $region32
      $region31: #{tpu_custom_call.1} parent=5 // pred_region
        %s147 = ssub.s32 %s12, 1
        %s148 = smul.u32 2, %s17
        %p149 = scmp.lt.s32.totalorder %s148, 3
        %s150 = scalar_select %p149, %s148, 3
        %s151 = smul.addr %s150, 6
        %s152 = smul.addr %s151, 8
        %s153 = scalar_lea.vmem %s0, %s152
        %p154 = pneg %p38
        %p155 = pneg %p35
        %p156 = pneg %p59
        %p157 = pneg %p56
        %p158 = pneg %p80
        %p159 = pneg %p77
        %p160 = pneg %p106
        %p161 = pneg %p103
        %s162 = sand.u32 %s93, 1
        %s163 = scalar_lea.sflag [#allocation3], %s162
        %s164 = sand.u32 %s93, 1
        %s165 = smul.addr %s164, 48
        %s166 = scalar_lea.vmem [#allocation2], %s165
        %s167 = smul.u32 2, %s17
        %p168 = scmp.lt.s32.totalorder %s167, 3
        %s169 = scalar_select %p168, %s167, 3
        %s170 = smul.addr %s169, 6
        %s171 = smul.addr %s170, 8
        %s172 = scalar_lea.vmem %s0, %s171
        %s173 = smul.u32 2, %s17
        %s174 = smul.u32 2, %s17
        %v175 = vld [vmem:[%s172] sm:$0xff]
        %v176 = vld [vmem:[%s172 + $0x8] sm:$0xff]
        %v177 = vld [vmem:[%s172 + $0x10] sm:$0xff]
        %v178 = vld [vmem:[%s172 + $0x18] sm:$0xff]
        %v179 = vld [vmem:[%s172 + $0x20] sm:$0xff]
        %v180 = vld [vmem:[%s172 + $0x28] sm:$0xff]
        %v181 = vld [vmem:[%s172 + $0x30] sm:$0xff]
        %v182 = vld [vmem:[%s172 + $0x38] sm:$0xff]
        %v183 = vld [vmem:[%s172 + $0x40] sm:$0xff]
        %v184 = vld [vmem:[%s172 + $0x48] sm:$0xff]
        %v185 = vld [vmem:[%s172 + $0x50] sm:$0xff]
        %v186 = vld [vmem:[%s172 + $0x58] sm:$0xff]
        %v187 = vld [vmem:[%s1] sm:$0xff]
        %v188 = vld [vmem:[%s1 + $0x8] sm:$0xff]
        %v189 = vld [vmem:[%s1 + $0x10] sm:$0xff]
        %v190 = vld [vmem:[%s1 + $0x18] sm:$0xff]
        %v191 = vld [vmem:[%s1 + $0x20] sm:$0xff]
        %v192 = vld [vmem:[%s1 + $0x28] sm:$0xff]
        %v193 = vld [vmem:[%s1 + $0x30] sm:$0xff]
        %v194 = vld [vmem:[%s1 + $0x38] sm:$0xff]
        %v195 = vld [vmem:[%s1 + $0x40] sm:$0xff]
        %v196 = vld [vmem:[%s1 + $0x48] sm:$0xff]
        %v197 = vld [vmem:[%s1 + $0x50] sm:$0xff]
        %v198 = vld [vmem:[%s1 + $0x58] sm:$0xff]
        %v199 = vld [vmem:[%s1 + $0x60] sm:$0xff]
        %v200 = vld [vmem:[%s1 + $0x68] sm:$0xff]
        %v201 = vld [vmem:[%s1 + $0x70] sm:$0xff]
        %v202 = vld [vmem:[%s1 + $0x78] sm:$0xff]
        %v203 = vld [vmem:[%s1 + $0x80] sm:$0xff]
        %v204 = vld [vmem:[%s1 + $0x88] sm:$0xff]
        %v205 = vld [vmem:[%s1 + $0x90] sm:$0xff]
        %v206 = vld [vmem:[%s1 + $0x98] sm:$0xff]
        %v207 = vld [vmem:[%s1 + $0xa0] sm:$0xff]
        %v208 = vld [vmem:[%s1 + $0xa8] sm:$0xff]
        %v209 = vld [vmem:[%s1 + $0xb0] sm:$0xff]
        %v210 = vld [vmem:[%s1 + $0xb8] sm:$0xff]
        %v211 = vld [vmem:[%s1 + $0xc0] sm:$0xff]
        %v212 = vld [vmem:[%s1 + $0xc8] sm:$0xff]
        %v213 = vld [vmem:[%s1 + $0xd0] sm:$0xff]
        %v214 = vld [vmem:[%s1 + $0xd8] sm:$0xff]
        %v215 = vld [vmem:[%s1 + $0xe0] sm:$0xff]
        %v216 = vld [vmem:[%s1 + $0xe8] sm:$0xff]
        %v217 = vld [vmem:[%s1 + $0xf0] sm:$0xff]
        %v218 = vld [vmem:[%s1 + $0xf8] sm:$0xff]
        %v219 = vld [vmem:[%s1 + $0x100] sm:$0xff]
        %v220 = vld [vmem:[%s1 + $0x108] sm:$0xff]
        %v221 = vld [vmem:[%s1 + $0x110] sm:$0xff]
        %v222 = vld [vmem:[%s1 + $0x118] sm:$0xff]
        %v223 = vld [vmem:[%s1 + $0x120] sm:$0xff]
        %v224 = vld [vmem:[%s1 + $0x128] sm:$0xff]
        %v225 = vld [vmem:[%s1 + $0x130] sm:$0xff]
        %v226 = vld [vmem:[%s1 + $0x138] sm:$0xff]
        %v227 = vld [vmem:[%s1 + $0x140] sm:$0xff]
        %v228 = vld [vmem:[%s1 + $0x148] sm:$0xff]
        %v229 = vld [vmem:[%s1 + $0x150] sm:$0xff]
        %v230 = vld [vmem:[%s1 + $0x158] sm:$0xff]
        %v231 = vld [vmem:[%s1 + $0x160] sm:$0xff]
        %v232 = vld [vmem:[%s1 + $0x168] sm:$0xff]
        %v233 = vld [vmem:[%s1 + $0x170] sm:$0xff]
        %v234 = vld [vmem:[%s1 + $0x178] sm:$0xff]
        %v235 = vld [vmem:[%s1 + $0x180] sm:$0xff]
        %v236 = vld [vmem:[%s1 + $0x188] sm:$0xff]
        %v237 = vld [vmem:[%s1 + $0x190] sm:$0xff]
        %v238 = vld [vmem:[%s1 + $0x198] sm:$0xff]
        %v239 = vld [vmem:[%s1 + $0x1a0] sm:$0xff]
        %v240 = vld [vmem:[%s1 + $0x1a8] sm:$0xff]
        %v241 = vld [vmem:[%s1 + $0x1b0] sm:$0xff]
        %v242 = vld [vmem:[%s1 + $0x1b8] sm:$0xff]
        %v243 = vld [vmem:[%s1 + $0x1c0] sm:$0xff]
        %v244 = vld [vmem:[%s1 + $0x1c8] sm:$0xff]
        %v245 = vld [vmem:[%s1 + $0x1d0] sm:$0xff]
        %v246 = vld [vmem:[%s1 + $0x1d8] sm:$0xff]
        %v247 = vld [vmem:[%s1 + $0x1e0] sm:$0xff]
        %v248 = vld [vmem:[%s1 + $0x1e8] sm:$0xff]
        %v249 = vld [vmem:[%s1 + $0x1f0] sm:$0xff]
        %v250 = vld [vmem:[%s1 + $0x1f8] sm:$0xff]
        %v251 = vld [vmem:[%s1 + $0x200] sm:$0xff]
        %v252 = vld [vmem:[%s1 + $0x208] sm:$0xff]
        %v253 = vld [vmem:[%s1 + $0x210] sm:$0xff]
        %v254 = vld [vmem:[%s1 + $0x218] sm:$0xff]
        %v255 = vld [vmem:[%s1 + $0x220] sm:$0xff]
        %v256 = vld [vmem:[%s1 + $0x228] sm:$0xff]
        %v257 = vld [vmem:[%s1 + $0x230] sm:$0xff]
        %v258 = vld [vmem:[%s1 + $0x238] sm:$0xff]
        %v259 = vld [vmem:[%s1 + $0x240] sm:$0xff]
        %v260 = vld [vmem:[%s1 + $0x248] sm:$0xff]
        %v261 = vld [vmem:[%s1 + $0x250] sm:$0xff]
        %v262 = vld [vmem:[%s1 + $0x258] sm:$0xff]
        %v263 = vld [vmem:[%s1 + $0x260] sm:$0xff]
        %v264 = vld [vmem:[%s1 + $0x268] sm:$0xff]
        %v265 = vld [vmem:[%s1 + $0x270] sm:$0xff]
        %v266 = vld [vmem:[%s1 + $0x278] sm:$0xff]
        %v267 = vld [vmem:[%s1 + $0x280] sm:$0xff]
        %v268 = vld [vmem:[%s1 + $0x288] sm:$0xff]
        %v269 = vld [vmem:[%s1 + $0x290] sm:$0xff]
        %v270 = vld [vmem:[%s1 + $0x298] sm:$0xff]
        %v271 = vld [vmem:[%s1 + $0x2a0] sm:$0xff]
        %v272 = vld [vmem:[%s1 + $0x2a8] sm:$0xff]
        %v273 = vld [vmem:[%s1 + $0x2b0] sm:$0xff]
        %v274 = vld [vmem:[%s1 + $0x2b8] sm:$0xff]
        %v275 = vld [vmem:[%s1 + $0x2c0] sm:$0xff]
        %v276 = vld [vmem:[%s1 + $0x2c8] sm:$0xff]
        %v277 = vld [vmem:[%s1 + $0x2d0] sm:$0xff]
        %v278 = vld [vmem:[%s1 + $0x2d8] sm:$0xff]
        %v279 = vld [vmem:[%s1 + $0x2e0] sm:$0xff]
        %v280 = vld [vmem:[%s1 + $0x2e8] sm:$0xff]
        %v281 = vld [vmem:[%s1 + $0x2f0] sm:$0xff]
        %v282 = vld [vmem:[%s1 + $0x2f8] sm:$0xff]
        %v283 = vld [vmem:[%s1 + $0x300] sm:$0xff]
        %v284 = vld [vmem:[%s1 + $0x308] sm:$0xff]
        %v285 = vld [vmem:[%s1 + $0x310] sm:$0xff]
        %v286 = vld [vmem:[%s1 + $0x318] sm:$0xff]
        %v287 = vld [vmem:[%s1 + $0x320] sm:$0xff]
        %v288 = vld [vmem:[%s1 + $0x328] sm:$0xff]
        %v289 = vld [vmem:[%s1 + $0x330] sm:$0xff]
        %v290 = vld [vmem:[%s1 + $0x338] sm:$0xff]
        %v291 = vld [vmem:[%s1 + $0x340] sm:$0xff]
        %v292 = vld [vmem:[%s1 + $0x348] sm:$0xff]
        %v293 = vld [vmem:[%s1 + $0x350] sm:$0xff]
        %v294 = vld [vmem:[%s1 + $0x358] sm:$0xff]
        %v295 = vld [vmem:[%s1 + $0x360] sm:$0xff]
        %v296 = vld [vmem:[%s1 + $0x368] sm:$0xff]
        %v297 = vld [vmem:[%s1 + $0x370] sm:$0xff]
        %v298 = vld [vmem:[%s1 + $0x378] sm:$0xff]
        %v299 = vld [vmem:[%s1 + $0x380] sm:$0xff]
        %v300 = vld [vmem:[%s1 + $0x388] sm:$0xff]
        %v301 = vld [vmem:[%s1 + $0x390] sm:$0xff]
        %v302 = vld [vmem:[%s1 + $0x398] sm:$0xff]
        %v303 = vld [vmem:[%s1 + $0x3a0] sm:$0xff]
        %v304 = vld [vmem:[%s1 + $0x3a8] sm:$0xff]
        %v305 = vld [vmem:[%s1 + $0x3b0] sm:$0xff]
        %v306 = vld [vmem:[%s1 + $0x3b8] sm:$0xff]
        %v307 = vld [vmem:[%s1 + $0x3c0] sm:$0xff]
        %v308 = vld [vmem:[%s1 + $0x3c8] sm:$0xff]
        %v309 = vld [vmem:[%s1 + $0x3d0] sm:$0xff]
        %v310 = vld [vmem:[%s1 + $0x3d8] sm:$0xff]
        %v311 = vld [vmem:[%s1 + $0x3e0] sm:$0xff]
        %v312 = vld [vmem:[%s1 + $0x3e8] sm:$0xff]
        %v313 = vld [vmem:[%s1 + $0x3f0] sm:$0xff]
        %v314 = vld [vmem:[%s1 + $0x3f8] sm:$0xff]
        %v315 = vld [vmem:[%s1 + $0x400] sm:$0xff]
        %v316 = vld [vmem:[%s1 + $0x408] sm:$0xff]
        %v317 = vld [vmem:[%s1 + $0x410] sm:$0xff]
        %v318 = vld [vmem:[%s1 + $0x418] sm:$0xff]
        %v319 = vld [vmem:[%s1 + $0x420] sm:$0xff]
        %v320 = vld [vmem:[%s1 + $0x428] sm:$0xff]
        %v321 = vld [vmem:[%s1 + $0x430] sm:$0xff]
        %v322 = vld [vmem:[%s1 + $0x438] sm:$0xff]
        %v323 = vld [vmem:[%s1 + $0x440] sm:$0xff]
        %v324 = vld [vmem:[%s1 + $0x448] sm:$0xff]
        %v325 = vld [vmem:[%s1 + $0x450] sm:$0xff]
        %v326 = vld [vmem:[%s1 + $0x458] sm:$0xff]
        %v327 = vld [vmem:[%s1 + $0x460] sm:$0xff]
        %v328 = vld [vmem:[%s1 + $0x468] sm:$0xff]
        %v329 = vld [vmem:[%s1 + $0x470] sm:$0xff]
        %v330 = vld [vmem:[%s1 + $0x478] sm:$0xff]
        %v331 = vld [vmem:[%s1 + $0x480] sm:$0xff]
        %v332 = vld [vmem:[%s1 + $0x488] sm:$0xff]
        %v333 = vld [vmem:[%s1 + $0x490] sm:$0xff]
        %v334 = vld [vmem:[%s1 + $0x498] sm:$0xff]
        %v335 = vld [vmem:[%s1 + $0x4a0] sm:$0xff]
        %v336 = vld [vmem:[%s1 + $0x4a8] sm:$0xff]
        %v337 = vld [vmem:[%s1 + $0x4b0] sm:$0xff]
        %v338 = vld [vmem:[%s1 + $0x4b8] sm:$0xff]
        %v339 = vld [vmem:[%s1 + $0x4c0] sm:$0xff]
        %v340 = vld [vmem:[%s1 + $0x4c8] sm:$0xff]
        %v341 = vld [vmem:[%s1 + $0x4d0] sm:$0xff]
        %v342 = vld [vmem:[%s1 + $0x4d8] sm:$0xff]
        %v343 = vld [vmem:[%s1 + $0x4e0] sm:$0xff]
        %v344 = vld [vmem:[%s1 + $0x4e8] sm:$0xff]
        %v345 = vld [vmem:[%s1 + $0x4f0] sm:$0xff]
        %v346 = vld [vmem:[%s1 + $0x4f8] sm:$0xff]
        %v347 = vld [vmem:[%s1 + $0x500] sm:$0xff]
        %v348 = vld [vmem:[%s1 + $0x508] sm:$0xff]
        %v349 = vld [vmem:[%s1 + $0x510] sm:$0xff]
        %v350 = vld [vmem:[%s1 + $0x518] sm:$0xff]
        %v351 = vld [vmem:[%s1 + $0x520] sm:$0xff]
        %v352 = vld [vmem:[%s1 + $0x528] sm:$0xff]
        %v353 = vld [vmem:[%s1 + $0x530] sm:$0xff]
        %v354 = vld [vmem:[%s1 + $0x538] sm:$0xff]
        %v355 = vld [vmem:[%s1 + $0x540] sm:$0xff]
        %v356 = vld [vmem:[%s1 + $0x548] sm:$0xff]
        %v357 = vld [vmem:[%s1 + $0x550] sm:$0xff]
        %v358 = vld [vmem:[%s1 + $0x558] sm:$0xff]
        %v359 = vld [vmem:[%s1 + $0x560] sm:$0xff]
        %v360 = vld [vmem:[%s1 + $0x568] sm:$0xff]
        %v361 = vld [vmem:[%s1 + $0x570] sm:$0xff]
        %v362 = vld [vmem:[%s1 + $0x578] sm:$0xff]
        %v363 = vld [vmem:[%s1 + $0x580] sm:$0xff]
        %v364 = vld [vmem:[%s1 + $0x588] sm:$0xff]
        %v365 = vld [vmem:[%s1 + $0x590] sm:$0xff]
        %v366 = vld [vmem:[%s1 + $0x598] sm:$0xff]
        %v367 = vld [vmem:[%s1 + $0x5a0] sm:$0xff]
        %v368 = vld [vmem:[%s1 + $0x5a8] sm:$0xff]
        %v369 = vld [vmem:[%s1 + $0x5b0] sm:$0xff]
        %v370 = vld [vmem:[%s1 + $0x5b8] sm:$0xff]
        %v371 = vld [vmem:[%s1 + $0x5c0] sm:$0xff]
        %v372 = vld [vmem:[%s1 + $0x5c8] sm:$0xff]
        %v373 = vld [vmem:[%s1 + $0x5d0] sm:$0xff]
        %v374 = vld [vmem:[%s1 + $0x5d8] sm:$0xff]
        %v375 = vld [vmem:[%s1 + $0x5e0] sm:$0xff]
        %v376 = vld [vmem:[%s1 + $0x5e8] sm:$0xff]
        %v377 = vld [vmem:[%s1 + $0x5f0] sm:$0xff]
        %v378 = vld [vmem:[%s1 + $0x5f8] sm:$0xff]
        %v379 = vld [vmem:[%s1 + $0x600] sm:$0xff]
        %v380 = vld [vmem:[%s1 + $0x608] sm:$0xff]
        %v381 = vld [vmem:[%s1 + $0x610] sm:$0xff]
        %v382 = vld [vmem:[%s1 + $0x618] sm:$0xff]
        %v383 = vld [vmem:[%s1 + $0x620] sm:$0xff]
        %v384 = vld [vmem:[%s1 + $0x628] sm:$0xff]
        %v385 = vld [vmem:[%s1 + $0x630] sm:$0xff]
        %v386 = vld [vmem:[%s1 + $0x638] sm:$0xff]
        %v387 = vld [vmem:[%s1 + $0x640] sm:$0xff]
        %v388 = vld [vmem:[%s1 + $0x648] sm:$0xff]
        %v389 = vld [vmem:[%s1 + $0x650] sm:$0xff]
        %v390 = vld [vmem:[%s1 + $0x658] sm:$0xff]
        %v391 = vld [vmem:[%s1 + $0x660] sm:$0xff]
        %v392 = vld [vmem:[%s1 + $0x668] sm:$0xff]
        %v393 = vld [vmem:[%s1 + $0x670] sm:$0xff]
        %v394 = vld [vmem:[%s1 + $0x678] sm:$0xff]
        %v395 = vld [vmem:[%s1 + $0x680] sm:$0xff]
        %v396 = vld [vmem:[%s1 + $0x688] sm:$0xff]
        %v397 = vld [vmem:[%s1 + $0x690] sm:$0xff]
        %v398 = vld [vmem:[%s1 + $0x698] sm:$0xff]
        %v399 = vld [vmem:[%s1 + $0x6a0] sm:$0xff]
        %v400 = vld [vmem:[%s1 + $0x6a8] sm:$0xff]
        %v401 = vld [vmem:[%s1 + $0x6b0] sm:$0xff]
        %v402 = vld [vmem:[%s1 + $0x6b8] sm:$0xff]
        %v403 = vld [vmem:[%s1 + $0x6c0] sm:$0xff]
        %v404 = vld [vmem:[%s1 + $0x6c8] sm:$0xff]
        %v405 = vld [vmem:[%s1 + $0x6d0] sm:$0xff]
        %v406 = vld [vmem:[%s1 + $0x6d8] sm:$0xff]
        %v407 = vld [vmem:[%s1 + $0x6e0] sm:$0xff]
        %v408 = vld [vmem:[%s1 + $0x6e8] sm:$0xff]
        %v409 = vld [vmem:[%s1 + $0x6f0] sm:$0xff]
        %v410 = vld [vmem:[%s1 + $0x6f8] sm:$0xff]
        %v411 = vld [vmem:[%s1 + $0x700] sm:$0xff]
        %v412 = vld [vmem:[%s1 + $0x708] sm:$0xff]
        %v413 = vld [vmem:[%s1 + $0x710] sm:$0xff]
        %v414 = vld [vmem:[%s1 + $0x718] sm:$0xff]
        %v415 = vld [vmem:[%s1 + $0x720] sm:$0xff]
        %v416 = vld [vmem:[%s1 + $0x728] sm:$0xff]
        %v417 = vld [vmem:[%s1 + $0x730] sm:$0xff]
        %v418 = vld [vmem:[%s1 + $0x738] sm:$0xff]
        %v419 = vld [vmem:[%s1 + $0x740] sm:$0xff]
        %v420 = vld [vmem:[%s1 + $0x748] sm:$0xff]
        %v421 = vld [vmem:[%s1 + $0x750] sm:$0xff]
        %v422 = vld [vmem:[%s1 + $0x758] sm:$0xff]
        %v423 = vld [vmem:[%s1 + $0x760] sm:$0xff]
        %v424 = vld [vmem:[%s1 + $0x768] sm:$0xff]
        %v425 = vld [vmem:[%s1 + $0x770] sm:$0xff]
        %v426 = vld [vmem:[%s1 + $0x778] sm:$0xff]
        %v427 = vld [vmem:[%s1 + $0x780] sm:$0xff]
        %v428 = vld [vmem:[%s1 + $0x788] sm:$0xff]
        %v429 = vld [vmem:[%s1 + $0x790] sm:$0xff]
        %v430 = vld [vmem:[%s1 + $0x798] sm:$0xff]
        %v431 = vld [vmem:[%s1 + $0x7a0] sm:$0xff]
        %v432 = vld [vmem:[%s1 + $0x7a8] sm:$0xff]
        %v433 = vld [vmem:[%s1 + $0x7b0] sm:$0xff]
        %v434 = vld [vmem:[%s1 + $0x7b8] sm:$0xff]
        %v435 = vld [vmem:[%s1 + $0x7c0] sm:$0xff]
        %v436 = vld [vmem:[%s1 + $0x7c8] sm:$0x1f]
        %v437 = vld [vmem:[%s1 + $0x7d0] sm:$0x1f]
        %v438 = vld [vmem:[%s1 + $0x7d8] sm:$0x1f]
        %v439 = vld [vmem:[%s2] sm:$0x7]
        %v441 = vlaneseq
        %v442 = vshrl.u32 %v441, 7
        %v443 = vsub.s32 0, %v442
        %v444 = vrot.slane %v439, %v443
        %v445 = vlaneseq
        %v446 = vshrl.u32 %v445, 7
        %v447 = vsub.s32 1, %v446
        %v448 = vrot.slane %v439, %v447
        %v449 = vlaneseq
        %v450 = vshrl.u32 %v449, 7
        %v451 = vsub.s32 2, %v450
        %v452 = vrot.slane %v439, %v451
        %vm456 = vcmask 236544
        %v458 = vsel %vm456, %v180, 0
        %v461 = vsel %vm456, %v186, 0
        %vm463 = vcmask 1044480
        %v465 = vsel %vm463, %v436, 0
        %v468 = vsel %vm463, %v437, 0
        %v471 = vsel %vm463, %v438, 0
        %473 = vmatprep.subr.mxu0 %v188
        %474 = vmatpush1.msra.mxu0 %v187
        %475 = vmatprep.subr.mxu0 %v191
        %476 = vmatpush1.msra.mxu0 %v190
        %477 = vmatprep.subr.mxu0 %v194
        %478 = vmatpush1.msra.mxu0 %v193
        %479 = vmatprep.subr.mxu0 %v197
        %480 = vmatpush1.msra.mxu0 %v196
        %481 = vmatprep.subr.mxu0 %v200
        %482 = vmatpush1.msra.mxu0 %v199
        %483 = vmatprep.subr.mxu0 %v203
        %484 = vmatpush1.msra.mxu0 %v202
        %485 = vmatprep.subr.mxu0 %v206
        %486 = vmatpush1.msra.mxu0 %v205
        %487 = vmatprep.subr.mxu0 %v209
        %488 = vmatpush1.msra.mxu0 %v208
        %489 = vmatprep.subr.mxu0 %v212
        %490 = vmatpush1.msra.mxu0 %v211
        %491 = vmatprep.subr.mxu0 %v215
        %492 = vmatpush1.msra.mxu0 %v214
        %493 = vmatprep.subr.mxu0 %v218
        %494 = vmatpush1.msra.mxu0 %v217
        %495 = vmatprep.subr.mxu0 %v221
        %496 = vmatpush1.msra.mxu0 %v220
        %497 = vmatprep.subr.mxu0 %v224
        %498 = vmatpush1.msra.mxu0 %v223
        %499 = vmatprep.subr.mxu0 %v227
        %500 = vmatpush1.msra.mxu0 %v226
        %501 = vmatprep.subr.mxu0 %v230
        %502 = vmatpush1.msra.mxu0 %v229
        %503 = vmatprep.subr.mxu0 %v233
        %504 = vmatpush1.msra.mxu0 %v232
        %505 = vmatprep.subr.mxu0 %v236
        %506 = vmatpush1.msra.mxu0 %v235
        %507 = vmatprep.subr.mxu0 %v239
        %508 = vmatpush1.msra.mxu0 %v238
        %509 = vmatprep.subr.mxu0 %v242
        %510 = vmatpush1.msra.mxu0 %v241
        %511 = vmatprep.subr.mxu0 %v245
        %512 = vmatpush1.msra.mxu0 %v244
        %513 = vmatprep.subr.mxu0 %v248
        %514 = vmatpush1.msra.mxu0 %v247
        %515 = vmatprep.subr.mxu0 %v251
        %516 = vmatpush1.msra.mxu0 %v250
        %517 = vmatprep.subr.mxu0 %v254
        %518 = vmatpush1.msra.mxu0 %v253
        %519 = vmatprep.subr.mxu0 %v257
        %520 = vmatpush1.msra.mxu0 %v256
        %521 = vmatprep.subr.mxu0 %v260
        %522 = vmatpush1.msra.mxu0 %v259
        %523 = vmatprep.subr.mxu0 %v263
        %524 = vmatpush1.msra.mxu0 %v262
        %525 = vmatprep.subr.mxu0 %v266
        %526 = vmatpush1.msra.mxu0 %v265
        %527 = vmatprep.subr.mxu0 %v269
        %528 = vmatpush1.msra.mxu0 %v268
        %529 = vmatprep.subr.mxu0 %v272
        %530 = vmatpush1.msra.mxu0 %v271
        %531 = vmatprep.subr.mxu0 %v275
        %532 = vmatpush1.msra.mxu0 %v274
        %533 = vmatprep.subr.mxu0 %v278
        %534 = vmatpush1.msra.mxu0 %v277
        %535 = vmatprep.subr.mxu0 %v281
        %536 = vmatpush1.msra.mxu0 %v280
        %537 = vmatprep.mubr.f32.mxu0 %v176
        %538 = vmatmul.mubr.f32.gmra.mrb[0].mxu0 %v175
        %v539 = vpop.f32.mrb[0].mxu0
        %v540 = vadd.f32 %v444, %v539
        %v541 = vpop.f32.mrb[0].mxu0
        %v542 = vadd.f32 %v448, %v541
        %543 = vmatprep.mubr.f32.mxu0 %v182
        %544 = vmatmul.mubr.f32.gmra.mrb[0].mxu0 %v181
        %v545 = vpop.f32.mrb[0].mxu0
        %v546 = vadd.f32 %v444, %v545
        %v547 = vpop.f32.mrb[0].mxu0
        %v548 = vadd.f32 %v448, %v547
        %549 = vdwg.mxu0
        %550 = vmatprep.subr.mxu0 %v284
        %551 = vmatpush1.msra.mxu0 %v283
        %552 = vmatprep.subr.mxu0 %v287
        %553 = vmatpush1.msra.mxu0 %v286
        %554 = vmatprep.subr.mxu0 %v290
        %555 = vmatpush1.msra.mxu0 %v289
        %556 = vmatprep.subr.mxu0 %v293
        %557 = vmatpush1.msra.mxu0 %v292
        %558 = vmatprep.subr.mxu0 %v296
        %559 = vmatpush1.msra.mxu0 %v295
        %560 = vmatprep.subr.mxu0 %v299
        %561 = vmatpush1.msra.mxu0 %v298
        %562 = vmatprep.subr.mxu0 %v302
        %563 = vmatpush1.msra.mxu0 %v301
        %564 = vmatprep.subr.mxu0 %v305
        %565 = vmatpush1.msra.mxu0 %v304
        %566 = vmatprep.subr.mxu0 %v308
        %567 = vmatpush1.msra.mxu0 %v307
        %568 = vmatprep.subr.mxu0 %v311
        %569 = vmatpush1.msra.mxu0 %v310
        %570 = vmatprep.subr.mxu0 %v314
        %571 = vmatpush1.msra.mxu0 %v313
        %572 = vmatprep.subr.mxu0 %v317
        %573 = vmatpush1.msra.mxu0 %v316
        %574 = vmatprep.subr.mxu0 %v320
        %575 = vmatpush1.msra.mxu0 %v319
        %576 = vmatprep.subr.mxu0 %v323
        %577 = vmatpush1.msra.mxu0 %v322
        %578 = vmatprep.subr.mxu0 %v326
        %579 = vmatpush1.msra.mxu0 %v325
        %580 = vmatprep.subr.mxu0 %v329
        %581 = vmatpush1.msra.mxu0 %v328
        %582 = vmatprep.subr.mxu0 %v332
        %583 = vmatpush1.msra.mxu0 %v331
        %584 = vmatprep.subr.mxu0 %v335
        %585 = vmatpush1.msra.mxu0 %v334
        %586 = vmatprep.subr.mxu0 %v338
        %587 = vmatpush1.msra.mxu0 %v337
        %588 = vmatprep.subr.mxu0 %v341
        %589 = vmatpush1.msra.mxu0 %v340
        %590 = vmatprep.subr.mxu0 %v344
        %591 = vmatpush1.msra.mxu0 %v343
        %592 = vmatprep.subr.mxu0 %v347
        %593 = vmatpush1.msra.mxu0 %v346
        %594 = vmatprep.subr.mxu0 %v350
        %595 = vmatpush1.msra.mxu0 %v349
        %596 = vmatprep.subr.mxu0 %v353
        %597 = vmatpush1.msra.mxu0 %v352
        %598 = vmatprep.subr.mxu0 %v356
        %599 = vmatpush1.msra.mxu0 %v355
        %600 = vmatprep.subr.mxu0 %v359
        %601 = vmatpush1.msra.mxu0 %v358
        %602 = vmatprep.subr.mxu0 %v362
        %603 = vmatpush1.msra.mxu0 %v361
        %604 = vmatprep.subr.mxu0 %v365
        %605 = vmatpush1.msra.mxu0 %v364
        %606 = vmatprep.subr.mxu0 %v368
        %607 = vmatpush1.msra.mxu0 %v367
        %608 = vmatprep.subr.mxu0 %v371
        %609 = vmatpush1.msra.mxu0 %v370
        %610 = vmatprep.subr.mxu0 %v374
        %611 = vmatpush1.msra.mxu0 %v373
        %612 = vmatprep.subr.mxu0 %v377
        %613 = vmatpush1.msra.mxu0 %v376
        %614 = vmatprep.mubr.f32.mxu0 %v178
        %615 = vmatmul.mubr.f32.gmra.mrb[0].mxu0 %v177
        %v616 = vpop.f32.mrb[0].mxu0
        %v617 = vadd.f32 %v540, %v616
        %v618 = vpop.f32.mrb[0].mxu0
        %v619 = vadd.f32 %v542, %v618
        %620 = vmatprep.mubr.f32.mxu0 %v184
        %621 = vmatmul.mubr.f32.gmra.mrb[0].mxu0 %v183
        %v622 = vpop.f32.mrb[0].mxu0
        %v623 = vadd.f32 %v546, %v622
        %v624 = vpop.f32.mrb[0].mxu0
        %v625 = vadd.f32 %v548, %v624
        %626 = vdwg.mxu0
        %627 = vmatprep.subr.mxu0 %v380
        %628 = vmatpush1.msra.mxu0 %v379
        %629 = vmatprep.subr.mxu0 %v383
        %630 = vmatpush1.msra.mxu0 %v382
        %631 = vmatprep.subr.mxu0 %v386
        %632 = vmatpush1.msra.mxu0 %v385
        %633 = vmatprep.subr.mxu0 %v389
        %634 = vmatpush1.msra.mxu0 %v388
        %635 = vmatprep.subr.mxu0 %v392
        %636 = vmatpush1.msra.mxu0 %v391
        %637 = vmatprep.subr.mxu0 %v395
        %638 = vmatpush1.msra.mxu0 %v394
        %639 = vmatprep.subr.mxu0 %v398
        %640 = vmatpush1.msra.mxu0 %v397
        %641 = vmatprep.subr.mxu0 %v401
        %642 = vmatpush1.msra.mxu0 %v400
        %643 = vmatprep.subr.mxu0 %v404
        %644 = vmatpush1.msra.mxu0 %v403
        %645 = vmatprep.subr.mxu0 %v407
        %646 = vmatpush1.msra.mxu0 %v406
        %647 = vmatprep.subr.mxu0 %v410
        %648 = vmatpush1.msra.mxu0 %v409
        %649 = vmatprep.subr.mxu0 %v413
        %650 = vmatpush1.msra.mxu0 %v412
        %651 = vmatprep.subr.mxu0 %v416
        %652 = vmatpush1.msra.mxu0 %v415
        %653 = vmatprep.subr.mxu0 %v419
        %654 = vmatpush1.msra.mxu0 %v418
        %655 = vmatprep.subr.mxu0 %v422
        %656 = vmatpush1.msra.mxu0 %v421
        %657 = vmatprep.subr.mxu0 %v425
        %658 = vmatpush1.msra.mxu0 %v424
        %659 = vmatprep.subr.mxu0 %v428
        %660 = vmatpush1.msra.mxu0 %v427
        %661 = vmatprep.subr.mxu0 %v431
        %662 = vmatpush1.msra.mxu0 %v430
        %663 = vmatprep.subr.mxu0 %v434
        %664 = vmatpush1.msra.mxu0 %v433
        %665 = vmatprep.subr.mxu0 %v468
        %666 = vmatpush1.msra.mxu0 %v465
        %667 = vmatprep.subr.mxu0 0.0
        %668 = vmatpush1.msra.mxu0 0.0
        %669 = vmatprep.subr.mxu0 0.0
        %670 = vmatpush1.msra.mxu0 0.0
        %671 = vmatprep.subr.mxu0 0.0
        %672 = vmatpush1.msra.mxu0 0.0
        %673 = vmatprep.subr.mxu0 0.0
        %674 = vmatpush1.msra.mxu0 0.0
        %675 = vmatprep.subr.mxu0 0.0
        %676 = vmatpush1.msra.mxu0 0.0
        %677 = vmatprep.subr.mxu0 0.0
        %678 = vmatpush1.msra.mxu0 0.0
        %679 = vmatprep.subr.mxu0 0.0
        %680 = vmatpush1.msra.mxu0 0.0
        %681 = vmatprep.subr.mxu0 0.0
        %682 = vmatpush1.msra.mxu0 0.0
        %683 = vmatprep.subr.mxu0 0.0
        %684 = vmatpush1.msra.mxu0 0.0
        %685 = vmatprep.subr.mxu0 0.0
        %686 = vmatpush1.msra.mxu0 0.0
        %687 = vmatprep.subr.mxu0 0.0
        %688 = vmatpush1.msra.mxu0 0.0
        %689 = vmatprep.subr.mxu0 0.0
        %690 = vmatpush1.msra.mxu0 0.0
        %691 = vmatprep.mubr.f32.mxu0 %v458
        %692 = vmatmul.mubr.f32.gmra.mrb[0].mxu0 %v179
        %v693 = vpop.f32.mrb[0].mxu0
        %v694 = vadd.f32 %v617, %v693
        %v695 = vpop.f32.mrb[0].mxu0
        %v696 = vadd.f32 %v619, %v695
        %697 = vmatprep.mubr.f32.mxu0 %v461
        %698 = vmatmul.mubr.f32.gmra.mrb[0].mxu0 %v185
        %v699 = vpop.f32.mrb[0].mxu0
        %v700 = vadd.f32 %v623, %v699
        %v701 = vpop.f32.mrb[0].mxu0
        %v702 = vadd.f32 %v625, %v701
        %703 = vdwg.mxu0
        %704 = vmatprep.subr.mxu0 0.0
        %705 = vmatpush1.msra.mxu0 %v189
        %706 = vmatprep.subr.mxu0 0.0
        %707 = vmatpush1.msra.mxu0 %v192
        %708 = vmatprep.subr.mxu0 0.0
        %709 = vmatpush1.msra.mxu0 %v195
        %710 = vmatprep.subr.mxu0 0.0
        %711 = vmatpush1.msra.mxu0 %v198
        %712 = vmatprep.subr.mxu0 0.0
        %713 = vmatpush1.msra.mxu0 %v201
        %714 = vmatprep.subr.mxu0 0.0
        %715 = vmatpush1.msra.mxu0 %v204
        %716 = vmatprep.subr.mxu0 0.0
        %717 = vmatpush1.msra.mxu0 %v207
        %718 = vmatprep.subr.mxu0 0.0
        %719 = vmatpush1.msra.mxu0 %v210
        %720 = vmatprep.subr.mxu0 0.0
        %721 = vmatpush1.msra.mxu0 %v213
        %722 = vmatprep.subr.mxu0 0.0
        %723 = vmatpush1.msra.mxu0 %v216
        %724 = vmatprep.subr.mxu0 0.0
        %725 = vmatpush1.msra.mxu0 %v219
        %726 = vmatprep.subr.mxu0 0.0
        %727 = vmatpush1.msra.mxu0 %v222
        %728 = vmatprep.subr.mxu0 0.0
        %729 = vmatpush1.msra.mxu0 %v225
        %730 = vmatprep.subr.mxu0 0.0
        %731 = vmatpush1.msra.mxu0 %v228
        %732 = vmatprep.subr.mxu0 0.0
        %733 = vmatpush1.msra.mxu0 %v231
        %734 = vmatprep.subr.mxu0 0.0
        %735 = vmatpush1.msra.mxu0 %v234
        %736 = vmatprep.subr.mxu0 0.0
        %737 = vmatpush1.msra.mxu0 %v237
        %738 = vmatprep.subr.mxu0 0.0
        %739 = vmatpush1.msra.mxu0 %v240
        %740 = vmatprep.subr.mxu0 0.0
        %741 = vmatpush1.msra.mxu0 %v243
        %742 = vmatprep.subr.mxu0 0.0
        %743 = vmatpush1.msra.mxu0 %v246
        %744 = vmatprep.subr.mxu0 0.0
        %745 = vmatpush1.msra.mxu0 %v249
        %746 = vmatprep.subr.mxu0 0.0
        %747 = vmatpush1.msra.mxu0 %v252
        %748 = vmatprep.subr.mxu0 0.0
        %749 = vmatpush1.msra.mxu0 %v255
        %750 = vmatprep.subr.mxu0 0.0
        %751 = vmatpush1.msra.mxu0 %v258
        %752 = vmatprep.subr.mxu0 0.0
        %753 = vmatpush1.msra.mxu0 %v261
        %754 = vmatprep.subr.mxu0 0.0
        %755 = vmatpush1.msra.mxu0 %v264
        %756 = vmatprep.subr.mxu0 0.0
        %757 = vmatpush1.msra.mxu0 %v267
        %758 = vmatprep.subr.mxu0 0.0
        %759 = vmatpush1.msra.mxu0 %v270
        %760 = vmatprep.subr.mxu0 0.0
        %761 = vmatpush1.msra.mxu0 %v273
        %762 = vmatprep.subr.mxu0 0.0
        %763 = vmatpush1.msra.mxu0 %v276
        %764 = vmatprep.subr.mxu0 0.0
        %765 = vmatpush1.msra.mxu0 %v279
        %766 = vmatprep.subr.mxu0 0.0
        %767 = vmatpush1.msra.mxu0 %v282
        %768 = vmatprep.mubr.f32.mxu0 %v176
        %769 = vmatmul.mubr.f32.gmra.mrb[0].mxu0 %v175
        %v770 = vpop.f32.mrb[0].mxu0
        %v771 = vadd.f32 %v452, %v770
        %v772 = vpop.f32.mrb[0].mxu0
        %773 = vmatprep.mubr.f32.mxu0 %v182
        %774 = vmatmul.mubr.f32.gmra.mrb[0].mxu0 %v181
        %v775 = vpop.f32.mrb[0].mxu0
        %v776 = vadd.f32 %v452, %v775
        %v777 = vpop.f32.mrb[0].mxu0
        %778 = vdwg.mxu0
        %779 = vmatprep.subr.mxu0 0.0
        %780 = vmatpush1.msra.mxu0 %v285
        %781 = vmatprep.subr.mxu0 0.0
        %782 = vmatpush1.msra.mxu0 %v288
        %783 = vmatprep.subr.mxu0 0.0
        %784 = vmatpush1.msra.mxu0 %v291
        %785 = vmatprep.subr.mxu0 0.0
        %786 = vmatpush1.msra.mxu0 %v294
        %787 = vmatprep.subr.mxu0 0.0
        %788 = vmatpush1.msra.mxu0 %v297
        %789 = vmatprep.subr.mxu0 0.0
        %790 = vmatpush1.msra.mxu0 %v300
        %791 = vmatprep.subr.mxu0 0.0
        %792 = vmatpush1.msra.mxu0 %v303
        %793 = vmatprep.subr.mxu0 0.0
        %794 = vmatpush1.msra.mxu0 %v306
        %795 = vmatprep.subr.mxu0 0.0
        %796 = vmatpush1.msra.mxu0 %v309
        %797 = vmatprep.subr.mxu0 0.0
        %798 = vmatpush1.msra.mxu0 %v312
        %799 = vmatprep.subr.mxu0 0.0
        %800 = vmatpush1.msra.mxu0 %v315
        %801 = vmatprep.subr.mxu0 0.0
        %802 = vmatpush1.msra.mxu0 %v318
        %803 = vmatprep.subr.mxu0 0.0
        %804 = vmatpush1.msra.mxu0 %v321
        %805 = vmatprep.subr.mxu0 0.0
        %806 = vmatpush1.msra.mxu0 %v324
        %807 = vmatprep.subr.mxu0 0.0
        %808 = vmatpush1.msra.mxu0 %v327
        %809 = vmatprep.subr.mxu0 0.0
        %810 = vmatpush1.msra.mxu0 %v330
        %811 = vmatprep.subr.mxu0 0.0
        %812 = vmatpush1.msra.mxu0 %v333
        %813 = vmatprep.subr.mxu0 0.0
        %814 = vmatpush1.msra.mxu0 %v336
        %815 = vmatprep.subr.mxu0 0.0
        %816 = vmatpush1.msra.mxu0 %v339
        %817 = vmatprep.subr.mxu0 0.0
        %818 = vmatpush1.msra.mxu0 %v342
        %819 = vmatprep.subr.mxu0 0.0
        %820 = vmatpush1.msra.mxu0 %v345
        %821 = vmatprep.subr.mxu0 0.0
        %822 = vmatpush1.msra.mxu0 %v348
        %823 = vmatprep.subr.mxu0 0.0
        %824 = vmatpush1.msra.mxu0 %v351
        %825 = vmatprep.subr.mxu0 0.0
        %826 = vmatpush1.msra.mxu0 %v354
        %827 = vmatprep.subr.mxu0 0.0
        %828 = vmatpush1.msra.mxu0 %v357
        %829 = vmatprep.subr.mxu0 0.0
        %830 = vmatpush1.msra.mxu0 %v360
        %831 = vmatprep.subr.mxu0 0.0
        %832 = vmatpush1.msra.mxu0 %v363
        %833 = vmatprep.subr.mxu0 0.0
        %834 = vmatpush1.msra.mxu0 %v366
        %835 = vmatprep.subr.mxu0 0.0
        %836 = vmatpush1.msra.mxu0 %v369
        %837 = vmatprep.subr.mxu0 0.0
        %838 = vmatpush1.msra.mxu0 %v372
        %839 = vmatprep.subr.mxu0 0.0
        %840 = vmatpush1.msra.mxu0 %v375
        %841 = vmatprep.subr.mxu0 0.0
        %842 = vmatpush1.msra.mxu0 %v378
        %843 = vmatprep.mubr.f32.mxu0 %v178
        %844 = vmatmul.mubr.f32.gmra.mrb[0].mxu0 %v177
        %v845 = vpop.f32.mrb[0].mxu0
        %v846 = vadd.f32 %v771, %v845
        %v847 = vpop.f32.mrb[0].mxu0
        %848 = vmatprep.mubr.f32.mxu0 %v184
        %849 = vmatmul.mubr.f32.gmra.mrb[0].mxu0 %v183
        %v850 = vpop.f32.mrb[0].mxu0
        %v851 = vadd.f32 %v776, %v850
        %v852 = vpop.f32.mrb[0].mxu0
        %853 = vdwg.mxu0
        %854 = vmatprep.subr.mxu0 0.0
        %855 = vmatpush1.msra.mxu0 %v381
        %856 = vmatprep.subr.mxu0 0.0
        %857 = vmatpush1.msra.mxu0 %v384
        %858 = vmatprep.subr.mxu0 0.0
        %859 = vmatpush1.msra.mxu0 %v387
        %860 = vmatprep.subr.mxu0 0.0
        %861 = vmatpush1.msra.mxu0 %v390
        %862 = vmatprep.subr.mxu0 0.0
        %863 = vmatpush1.msra.mxu0 %v393
        %864 = vmatprep.subr.mxu0 0.0
        %865 = vmatpush1.msra.mxu0 %v396
        %866 = vmatprep.subr.mxu0 0.0
        %867 = vmatpush1.msra.mxu0 %v399
        %868 = vmatprep.subr.mxu0 0.0
        %869 = vmatpush1.msra.mxu0 %v402
        %870 = vmatprep.subr.mxu0 0.0
        %871 = vmatpush1.msra.mxu0 %v405
        %872 = vmatprep.subr.mxu0 0.0
        %873 = vmatpush1.msra.mxu0 %v408
        %874 = vmatprep.subr.mxu0 0.0
        %875 = vmatpush1.msra.mxu0 %v411
        %876 = vmatprep.subr.mxu0 0.0
        %877 = vmatpush1.msra.mxu0 %v414
        %878 = vmatprep.subr.mxu0 0.0
        %879 = vmatpush1.msra.mxu0 %v417
        %880 = vmatprep.subr.mxu0 0.0
        %881 = vmatpush1.msra.mxu0 %v420
        %882 = vmatprep.subr.mxu0 0.0
        %883 = vmatpush1.msra.mxu0 %v423
        %884 = vmatprep.subr.mxu0 0.0
        %885 = vmatpush1.msra.mxu0 %v426
        %886 = vmatprep.subr.mxu0 0.0
        %887 = vmatpush1.msra.mxu0 %v429
        %888 = vmatprep.subr.mxu0 0.0
        %889 = vmatpush1.msra.mxu0 %v432
        %890 = vmatprep.subr.mxu0 0.0
        %891 = vmatpush1.msra.mxu0 %v435
        %892 = vmatprep.subr.mxu0 0.0
        %893 = vmatpush1.msra.mxu0 %v471
        %894 = vmatprep.subr.mxu0 0.0
        %895 = vmatpush1.msra.mxu0 0.0
        %896 = vmatprep.subr.mxu0 0.0
        %897 = vmatpush1.msra.mxu0 0.0
        %898 = vmatprep.subr.mxu0 0.0
        %899 = vmatpush1.msra.mxu0 0.0
        %900 = vmatprep.subr.mxu0 0.0
        %901 = vmatpush1.msra.mxu0 0.0
        %902 = vmatprep.subr.mxu0 0.0
        %903 = vmatpush1.msra.mxu0 0.0
        %904 = vmatprep.subr.mxu0 0.0
        %905 = vmatpush1.msra.mxu0 0.0
        %906 = vmatprep.subr.mxu0 0.0
        %907 = vmatpush1.msra.mxu0 0.0
        %908 = vmatprep.subr.mxu0 0.0
        %909 = vmatpush1.msra.mxu0 0.0
        %910 = vmatprep.subr.mxu0 0.0
        %911 = vmatpush1.msra.mxu0 0.0
        %912 = vmatprep.subr.mxu0 0.0
        %913 = vmatpush1.msra.mxu0 0.0
        %914 = vmatprep.subr.mxu0 0.0
        %915 = vmatpush1.msra.mxu0 0.0
        %916 = vmatprep.subr.mxu0 0.0
        %917 = vmatpush1.msra.mxu0 0.0
        %918 = vmatprep.mubr.f32.mxu0 %v458
        %919 = vmatmul.mubr.f32.gmra.mrb[0].mxu0 %v179
        %v920 = vpop.f32.mrb[0].mxu0
        %v921 = vadd.f32 %v846, %v920
        %v922 = vpop.f32.mrb[0].mxu0
        %923 = vmatprep.mubr.f32.mxu0 %v461
        %924 = vmatmul.mubr.f32.gmra.mrb[0].mxu0 %v185
        %v925 = vpop.f32.mrb[0].mxu0
        %v926 = vadd.f32 %v851, %v925
        %v927 = vpop.f32.mrb[0].mxu0
        %928 = vdwg.mxu0
        %929 = vst [vmem:[%s166] sm:$0xff] %v694
        %930 = vst [vmem:[%s166 + $0x8] sm:$0xff] %v696
        %vm931 = vcmask 523264
        %932 = vst.msk [vmem:[%s166 + $0x10] sm:$0xff] %vm931, %v921
        %933 = vst [vmem:[%s166 + $0x18] sm:$0xff] %v700
        %934 = vst [vmem:[%s166 + $0x20] sm:$0xff] %v702
        %935 = vst.msk [vmem:[%s166 + $0x28] sm:$0xff] %vm931, %v926
        %s936 = sand.u32 %s93, 1
        %s937 = scalar_lea.sflag [#allocation3], %s936
        %s938 = sand.u32 %s93, 1
        %s939 = smul.addr %s938, 48
        %s940 = scalar_lea.vmem [#allocation2], %s939
        // Predicated region
        $region33: #{tpu_custom_call.1} parent=31 // pred_check
          %p941 = pneg %p103
        $region34: #{tpu_custom_call.1} parent=31 // pred_check_branch
          %943 = sbr.rel (%p941) target = $region36
        $region35: #{tpu_custom_call.1} parent=31 // pred_region
          %s944 = smul.u32 2, %s17
          %s946 = ssub.s32 768, 768
          %947 = vsyncadd %s937, %s946
          %s948 = smul.addr %s944, 3
          %s949 = smul.addr %s948, 128
          %s950 = scalar_lea.hbm %s3, %s949
          %s951 = sshll.u32 %s940, 4
          %s952 = int_to_ptr.vmem [resolvable:$true] %s951
          %957 = dma.vmem_to_hbm [thread:$0]  %s952, 768, %s950, %s937, 384, 384, 24
        $region36: #{tpu_custom_call.1} parent=31 // pred_fallthru
          _
      $region32: #{tpu_custom_call.1} parent=5 // pred_fallthru
        _
      %p958 = scmp.le.s32.totalorder 2, %s12
      // Predicated region
      $region37: #{tpu_custom_call.1} parent=5 // pred_check
        %p959 = pneg %p958
      $region38: #{tpu_custom_call.1} parent=5 // pred_check_branch
        %961 = sbr.rel (%p959) target = $region40
      $region39: #{tpu_custom_call.1} parent=5 // pred_region
        %s962 = ssub.s32 %s12, 2
        // Predicated region
        $region41: #{tpu_custom_call.1} parent=39 // pred_check
          %p963 = pneg %p109
        $region42: #{tpu_custom_call.1} parent=39 // pred_check_branch
          %965 = sbr.rel (%p963) target = $region44
        $region43: #{tpu_custom_call.1} parent=39 // pred_region
          %s966 = sand.u32 %s94, 1
          %s967 = scalar_lea.sflag [#allocation3], %s966
          %s968 = sand.u32 %s94, 1
          %s969 = smul.addr %s968, 48
          %s970 = scalar_lea.vmem [#allocation2], %s969
          %971 = dma.done %s967, 768
        $region44: #{tpu_custom_call.1} parent=39 // pred_fallthru
          _
      $region40: #{tpu_custom_call.1} parent=5 // pred_fallthru
        _
    $region6: #{tpu_custom_call.1} parent=1 // loop_footer
      %s16 = sadd.s32 1, %s12
    $region7: #{tpu_custom_call.1} parent=1 // loop_footer_branch
      %11 = sbr.rel target = $region3
    $region8: #{tpu_custom_call.1} parent=1 // loop_exit
      _
    %972 = vsyncpa [#allocation3], 1
    %s973 = scalar_lea.sflag [#allocation3], 1
    %974 = vsyncpa %s973, 1

</llo_original>
